<compile_context>
chip_gen: v6e
topology: v6e:2x2x1
jax: 0.10.0
libtpu: 0.0.40
codegen_flags: <defaults>
</compile_context>

<pallas_src>
import jax
import jax.numpy as jnp
from jax import lax
from jax.experimental import pallas as pl
from jax.experimental.pallas import tpu as pltpu

# -------------------- problem sizes --------------------
B_IN, F_IN, F_OUT = 2, 3, 5          # Linear(3, 5)
C_IN, C_OUT, K = 6, 1, 5             # Conv2d(6, 1, kernel 5, pad 2)
H, W = 8, 8                          # spatial size of the bridged conv input
PAD = 2

# TPU-friendly output slab (8 sublanes x 128 lanes, f32 = exactly one vreg)
M_PAD = 8
LANES = 128


# ==================== single fused kernel ====================
def fused_forward_kernel(x_ref, lin_ref, conv_ref, o_ref):
    # x_ref   : (2, 4)   SMEM  -- raw input x, cols :3 valid
    # lin_ref : (5, 4)   SMEM  -- [:, :3] = Linear weight W, [:, 3] = Linear bias
    # conv_ref: (8, 128) VMEM  -- rows :5 = 4*T (collapsed conv matrix, *4 folded),
    #                             row 5 = conv bias broadcast over the 64 valid lanes
    # o_ref   : (8, 128) VMEM  -- rows :2 / lanes :64 valid, everything else 0

    # ---- stage 1: Linear(3,5) + clamp(0,6), 10 scalar expressions ----------
    # K=3 contraction on the scalar unit: cheaper than an MXU push->pop round
    # trip that the downstream matmul would have to wait on (MRF on v5e/v6e).
    def y_scalar(b, n):
        acc = lin_ref[n, 3]                      # linear bias
        for k in range(F_IN):
            acc = acc + x_ref[b, k] * lin_ref[n, k]
        return jnp.minimum(jnp.maximum(acc, 0.0), 6.0)   # clamp_min(0), clamp_max(6)

    # ---- stage 2: collapsed conv = 5 scalar*row MACs per batch row (VPU) ----
    # The bridged conv input is constant across its 6 channels and 8 rows, so
    # Conv2d(6,1,5x5,pad=2) is exactly out[b,:] = conv_b + sum_n y[b,n]*T4[n,:],
    # with the *4 scale already folded into T4 and conv_b into row 5 of the slab.
    ct = [conv_ref[n:n + 1, :] for n in range(F_OUT)]    # five (1,128) rows
    cb_row = conv_ref[F_OUT:F_OUT + 1, :]                # conv-bias row (1,128)

    def out_row(b):
        acc = cb_row
        for n in range(F_OUT):
            acc = acc + y_scalar(b, n) * ct[n]
        return acc                                        # (1, 128)

    # Assemble the lane-dense (8,128) slab with one unmasked full-tile store.
    rid = lax.broadcasted_iota(jnp.int32, (M_PAD, LANES), 0)
    o_ref[...] = jnp.where(rid == 0, out_row(0),
                           jnp.where(rid == 1, out_row(1), 0.0))


# ==================== one-time weight preparation ====================
def build_conv_slab(conv_w, conv_b):
    """Collapse Conv2d(6,1,5x5,pad=2) over the broadcast bridge into an (8,128) slab.

    out[b, 0, i, j] = conv_b + sum_w  v5[b, w] * T[w, i*W + j]
    where T[w, i*W+j] = R[i, w-j+PAD] (0 if the kw tap falls outside the 5x5
    kernel), and R[i, kw] = sum over valid kh of (sum_c conv_w[0, c, kh, kw]).
    The *4 activation scale is folded into T; conv_b goes into slab row 5.
    """
    wsum = jnp.sum(conv_w[0].astype(jnp.float32), axis=0)                  # (K, K)
    i_idx = jnp.arange(H)
    kh_idx = jnp.arange(K)
    row_valid = ((i_idx[:, None] + kh_idx[None, :] - PAD >= 0) &
                 (i_idx[:, None] + kh_idx[None, :] - PAD < H)).astype(jnp.float32)  # (H, K)
    # R[i, kw] = sum_kh row_valid[i, kh] * wsum[kh, kw]   (exact f32, no matmul)
    R = jnp.sum(row_valid[:, :, None] * wsum[None, :, :], axis=1)          # (H, K)

    w_i = jnp.arange(F_OUT)[:, None, None]                                 # (5,1,1)
    i_i = jnp.arange(H)[None, :, None]                                     # (1,H,1)
    j_i = jnp.arange(W)[None, None, :]                                     # (1,1,W)
    kw = jnp.broadcast_to(w_i - j_i + PAD, (F_OUT, H, W))                  # tap column index
    i_b = jnp.broadcast_to(i_i, (F_OUT, H, W))
    valid = (kw >= 0) & (kw < K)
    gathered = R[i_b, jnp.clip(kw, 0, K - 1)]                              # (5, H, W)
    T = jnp.where(valid, gathered, 0.0).reshape(F_OUT, H * W)              # (5, 64)

    slab = jnp.zeros((M_PAD, LANES), jnp.float32)
    slab = slab.at[:F_OUT, :H * W].set(4.0 * T)          # fold the *4 scale
    slab = slab.at[F_OUT, :H * W].set(conv_b[0])         # fold the conv bias
    return slab


def prepare_params(params):
    """Transform all weights ONCE (hoisted out of the per-call hot path)."""
    lin = jnp.zeros((F_OUT, 4), jnp.float32)
    lin = lin.at[:, :F_IN].set(params["lin_w"])
    lin = lin.at[:, F_IN].set(params["lin_b"])
    return {
        "lin_smem": lin,                                           # (5, 4)
        "conv_slab": build_conv_slab(params["conv_w"], params["conv_b"]),  # (8, 128)
    }


# ==================== forward ====================
def model_forward(x, prep):
    out_slab = pl.pallas_call(
        fused_forward_kernel,
        out_shape=jax.ShapeDtypeStruct((M_PAD, LANES), jnp.float32),
        in_specs=[
            pl.BlockSpec(memory_space=pltpu.MemorySpace.SMEM),   # x (2,3) scalars
            pl.BlockSpec(memory_space=pltpu.MemorySpace.SMEM),   # linear W|b table
            pl.BlockSpec(memory_space=pltpu.MemorySpace.VMEM),   # conv slab (8,128)
        ],
        out_specs=pl.BlockSpec(memory_space=pltpu.MemorySpace.VMEM),
        cost_estimate=pl.CostEstimate(flops=2700, transcendentals=0,
                                      bytes_accessed=8300),
    )(x, prep["lin_smem"], prep["conv_slab"])

    # Layout plumbing only: slice the valid (2, 64) region, reshape to NCHW.
    return out_slab[:B_IN, :H * W].reshape(B_IN, C_OUT, H, W)


def reference_forward(x, params):
    """Pure-JAX reference of the same bridged forward (sanity check only)."""
    v5 = jnp.clip(jnp.dot(x, params["lin_w"].T, precision=lax.Precision.HIGHEST)
                  + params["lin_b"], 0.0, 6.0) * 4.0                         # (2, 5)
    conv_in = jnp.broadcast_to(v5.reshape(B_IN, 1, 1, F_OUT), (B_IN, C_IN, H, F_OUT))
    conv_in = jnp.pad(conv_in, ((0, 0), (0, 0), (0, 0), (0, W - F_OUT)))     # (2, 6, 8, 8)
    # TODO(synk): Conv2d(..., kernel_size=(5,)) is ill-formed for 2-D conv; we
    # interpret it as a square 5x5 kernel with padding 2, stride 1.
    out = lax.conv_general_dilated(
        conv_in, params["conv_w"], window_strides=(1, 1),
        padding=((PAD, PAD), (PAD, PAD)),
        dimension_numbers=("NCHW", "OIHW", "NCHW"),
        precision=lax.Precision.HIGHEST)
    return out + params["conv_b"].reshape(1, 1, 1, 1)


def init_params(key):
    k1, k2, k3, k4 = jax.random.split(key, 4)
    lin_bound = 1.0 / jnp.sqrt(F_IN)
    conv_bound = 1.0 / jnp.sqrt(C_IN * K * K)
    return {
        "lin_w": jax.random.uniform(k1, (F_OUT, F_IN), jnp.float32, -lin_bound, lin_bound),
        "lin_b": jax.random.uniform(k2, (F_OUT,), jnp.float32, -lin_bound, lin_bound),
        "conv_w": jax.random.uniform(k3, (C_OUT, C_IN, K, K), jnp.float32, -conv_bound, conv_bound),
        "conv_b": jax.random.uniform(k4, (C_OUT,), jnp.float32, -conv_bound, conv_bound),
    }


if __name__ == "__main__":
    key = jax.random.PRNGKey(0)
    pkey, xkey = jax.random.split(key)
    params = init_params(pkey)
    prep = prepare_params(params)                                  # one-time weight prep
    x = jax.random.normal(xkey, (B_IN, F_IN), jnp.float32)         # matches torch.randn(2, 3)

    fwd = jax.jit(model_forward)
    out = fwd(x, prep)
    jax.block_until_ready(out)

    assert out.shape == (B_IN, C_OUT, H, W) and out.dtype == jnp.float32

    # Tight sanity check vs. a pure-JAX implementation of the same bridged
    # forward (both paths are exact f32 now; only summation order differs).
    ref = reference_forward(x, params)
    rel_err = float(jnp.max(jnp.abs(out - ref)) / (jnp.max(jnp.abs(ref)) + 1e-6))
    assert rel_err < 1e-4, f"fused kernel mismatch vs reference: rel_err={rel_err}"

    print("KERNEL_OK")
</pallas_src>

<mosaic_0001>
module attributes {stable_mosaic.version = 11 : i64} {
  func.func @fused_forward_kernel(%arg0: memref<2x3xf32, #tpu.memory_space<smem>>, %arg1: memref<5x4xf32, #tpu.memory_space<smem>>, %arg2: memref<8x128xf32, #tpu.memory_space<vmem>>, %arg3: memref<8x128xf32, #tpu.memory_space<vmem>>) attributes {dimension_semantics = [], scalar_prefetch = 0 : i64, scratch_operands = 0 : i64, tpu.core_type = #tpu.core_type<tc>} {
    %c0 = arith.constant 0 : index
    %c0_0 = arith.constant 0 : index
    %0 = vector.load %arg2[%c0, %c0_0] : memref<8x128xf32, #tpu.memory_space<vmem>>, vector<1x128xf32>
    %c1 = arith.constant 1 : index
    %c0_1 = arith.constant 0 : index
    %1 = vector.load %arg2[%c1, %c0_1] : memref<8x128xf32, #tpu.memory_space<vmem>>, vector<1x128xf32>
    %c2 = arith.constant 2 : index
    %c0_2 = arith.constant 0 : index
    %2 = vector.load %arg2[%c2, %c0_2] : memref<8x128xf32, #tpu.memory_space<vmem>>, vector<1x128xf32>
    %c3 = arith.constant 3 : index
    %c0_3 = arith.constant 0 : index
    %3 = vector.load %arg2[%c3, %c0_3] : memref<8x128xf32, #tpu.memory_space<vmem>>, vector<1x128xf32>
    %c4 = arith.constant 4 : index
    %c0_4 = arith.constant 0 : index
    %4 = vector.load %arg2[%c4, %c0_4] : memref<8x128xf32, #tpu.memory_space<vmem>>, vector<1x128xf32>
    %c5 = arith.constant 5 : index
    %c0_5 = arith.constant 0 : index
    %5 = vector.load %arg2[%c5, %c0_5] : memref<8x128xf32, #tpu.memory_space<vmem>>, vector<1x128xf32>
    %6 = tpu.iota {dimensions = array<i32: 0>} : vector<8x128xi32>
    %c0_i32 = arith.constant 0 : i32
    %7 = vector.broadcast %c0_i32 : i32 to vector<8x128xi32>
    %8 = arith.cmpi eq, %6, %7 : vector<8x128xi32>
    %c0_6 = arith.constant 0 : index
    %c3_7 = arith.constant 3 : index
    %9 = memref.load %arg1[%c0_6, %c3_7] : memref<5x4xf32, #tpu.memory_space<smem>>
    %c0_8 = arith.constant 0 : index
    %c0_9 = arith.constant 0 : index
    %10 = memref.load %arg0[%c0_8, %c0_9] : memref<2x3xf32, #tpu.memory_space<smem>>
    %c0_10 = arith.constant 0 : index
    %c0_11 = arith.constant 0 : index
    %11 = memref.load %arg1[%c0_10, %c0_11] : memref<5x4xf32, #tpu.memory_space<smem>>
    %12 = arith.mulf %10, %11 : f32
    %13 = arith.addf %9, %12 : f32
    %c0_12 = arith.constant 0 : index
    %c1_13 = arith.constant 1 : index
    %14 = memref.load %arg0[%c0_12, %c1_13] : memref<2x3xf32, #tpu.memory_space<smem>>
    %c0_14 = arith.constant 0 : index
    %c1_15 = arith.constant 1 : index
    %15 = memref.load %arg1[%c0_14, %c1_15] : memref<5x4xf32, #tpu.memory_space<smem>>
    %16 = arith.mulf %14, %15 : f32
    %17 = arith.addf %13, %16 : f32
    %c0_16 = arith.constant 0 : index
    %c2_17 = arith.constant 2 : index
    %18 = memref.load %arg0[%c0_16, %c2_17] : memref<2x3xf32, #tpu.memory_space<smem>>
    %c0_18 = arith.constant 0 : index
    %c2_19 = arith.constant 2 : index
    %19 = memref.load %arg1[%c0_18, %c2_19] : memref<5x4xf32, #tpu.memory_space<smem>>
    %20 = arith.mulf %18, %19 : f32
    %21 = arith.addf %17, %20 : f32
    %cst = arith.constant 0.000000e+00 : f32
    %22 = arith.maximumf %21, %cst : f32
    %cst_20 = arith.constant 6.000000e+00 : f32
    %23 = arith.minimumf %22, %cst_20 : f32
    %24 = vector.broadcast %23 : f32 to vector<1x128xf32>
    %25 = arith.mulf %24, %0 : vector<1x128xf32>
    %26 = arith.addf %5, %25 : vector<1x128xf32>
    %c1_21 = arith.constant 1 : index
    %c3_22 = arith.constant 3 : index
    %27 = memref.load %arg1[%c1_21, %c3_22] : memref<5x4xf32, #tpu.memory_space<smem>>
    %c0_23 = arith.constant 0 : index
    %c0_24 = arith.constant 0 : index
    %28 = memref.load %arg0[%c0_23, %c0_24] : memref<2x3xf32, #tpu.memory_space<smem>>
    %c1_25 = arith.constant 1 : index
    %c0_26 = arith.constant 0 : index
    %29 = memref.load %arg1[%c1_25, %c0_26] : memref<5x4xf32, #tpu.memory_space<smem>>
    %30 = arith.mulf %28, %29 : f32
    %31 = arith.addf %27, %30 : f32
    %c0_27 = arith.constant 0 : index
    %c1_28 = arith.constant 1 : index
    %32 = memref.load %arg0[%c0_27, %c1_28] : memref<2x3xf32, #tpu.memory_space<smem>>
    %c1_29 = arith.constant 1 : index
    %c1_30 = arith.constant 1 : index
    %33 = memref.load %arg1[%c1_29, %c1_30] : memref<5x4xf32, #tpu.memory_space<smem>>
    %34 = arith.mulf %32, %33 : f32
    %35 = arith.addf %31, %34 : f32
    %c0_31 = arith.constant 0 : index
    %c2_32 = arith.constant 2 : index
    %36 = memref.load %arg0[%c0_31, %c2_32] : memref<2x3xf32, #tpu.memory_space<smem>>
    %c1_33 = arith.constant 1 : index
    %c2_34 = arith.constant 2 : index
    %37 = memref.load %arg1[%c1_33, %c2_34] : memref<5x4xf32, #tpu.memory_space<smem>>
    %38 = arith.mulf %36, %37 : f32
    %39 = arith.addf %35, %38 : f32
    %cst_35 = arith.constant 0.000000e+00 : f32
    %40 = arith.maximumf %39, %cst_35 : f32
    %cst_36 = arith.constant 6.000000e+00 : f32
    %41 = arith.minimumf %40, %cst_36 : f32
    %42 = vector.broadcast %41 : f32 to vector<1x128xf32>
    %43 = arith.mulf %42, %1 : vector<1x128xf32>
    %44 = arith.addf %26, %43 : vector<1x128xf32>
    %c2_37 = arith.constant 2 : index
    %c3_38 = arith.constant 3 : index
    %45 = memref.load %arg1[%c2_37, %c3_38] : memref<5x4xf32, #tpu.memory_space<smem>>
    %c0_39 = arith.constant 0 : index
    %c0_40 = arith.constant 0 : index
    %46 = memref.load %arg0[%c0_39, %c0_40] : memref<2x3xf32, #tpu.memory_space<smem>>
    %c2_41 = arith.constant 2 : index
    %c0_42 = arith.constant 0 : index
    %47 = memref.load %arg1[%c2_41, %c0_42] : memref<5x4xf32, #tpu.memory_space<smem>>
    %48 = arith.mulf %46, %47 : f32
    %49 = arith.addf %45, %48 : f32
    %c0_43 = arith.constant 0 : index
    %c1_44 = arith.constant 1 : index
    %50 = memref.load %arg0[%c0_43, %c1_44] : memref<2x3xf32, #tpu.memory_space<smem>>
    %c2_45 = arith.constant 2 : index
    %c1_46 = arith.constant 1 : index
    %51 = memref.load %arg1[%c2_45, %c1_46] : memref<5x4xf32, #tpu.memory_space<smem>>
    %52 = arith.mulf %50, %51 : f32
    %53 = arith.addf %49, %52 : f32
    %c0_47 = arith.constant 0 : index
    %c2_48 = arith.constant 2 : index
    %54 = memref.load %arg0[%c0_47, %c2_48] : memref<2x3xf32, #tpu.memory_space<smem>>
    %c2_49 = arith.constant 2 : index
    %c2_50 = arith.constant 2 : index
    %55 = memref.load %arg1[%c2_49, %c2_50] : memref<5x4xf32, #tpu.memory_space<smem>>
    %56 = arith.mulf %54, %55 : f32
    %57 = arith.addf %53, %56 : f32
    %cst_51 = arith.constant 0.000000e+00 : f32
    %58 = arith.maximumf %57, %cst_51 : f32
    %cst_52 = arith.constant 6.000000e+00 : f32
    %59 = arith.minimumf %58, %cst_52 : f32
    %60 = vector.broadcast %59 : f32 to vector<1x128xf32>
    %61 = arith.mulf %60, %2 : vector<1x128xf32>
    %62 = arith.addf %44, %61 : vector<1x128xf32>
    %c3_53 = arith.constant 3 : index
    %c3_54 = arith.constant 3 : index
    %63 = memref.load %arg1[%c3_53, %c3_54] : memref<5x4xf32, #tpu.memory_space<smem>>
    %c0_55 = arith.constant 0 : index
    %c0_56 = arith.constant 0 : index
    %64 = memref.load %arg0[%c0_55, %c0_56] : memref<2x3xf32, #tpu.memory_space<smem>>
    %c3_57 = arith.constant 3 : index
    %c0_58 = arith.constant 0 : index
    %65 = memref.load %arg1[%c3_57, %c0_58] : memref<5x4xf32, #tpu.memory_space<smem>>
    %66 = arith.mulf %64, %65 : f32
    %67 = arith.addf %63, %66 : f32
    %c0_59 = arith.constant 0 : index
    %c1_60 = arith.constant 1 : index
    %68 = memref.load %arg0[%c0_59, %c1_60] : memref<2x3xf32, #tpu.memory_space<smem>>
    %c3_61 = arith.constant 3 : index
    %c1_62 = arith.constant 1 : index
    %69 = memref.load %arg1[%c3_61, %c1_62] : memref<5x4xf32, #tpu.memory_space<smem>>
    %70 = arith.mulf %68, %69 : f32
    %71 = arith.addf %67, %70 : f32
    %c0_63 = arith.constant 0 : index
    %c2_64 = arith.constant 2 : index
    %72 = memref.load %arg0[%c0_63, %c2_64] : memref<2x3xf32, #tpu.memory_space<smem>>
    %c3_65 = arith.constant 3 : index
    %c2_66 = arith.constant 2 : index
    %73 = memref.load %arg1[%c3_65, %c2_66] : memref<5x4xf32, #tpu.memory_space<smem>>
    %74 = arith.mulf %72, %73 : f32
    %75 = arith.addf %71, %74 : f32
    %cst_67 = arith.constant 0.000000e+00 : f32
    %76 = arith.maximumf %75, %cst_67 : f32
    %cst_68 = arith.constant 6.000000e+00 : f32
    %77 = arith.minimumf %76, %cst_68 : f32
    %78 = vector.broadcast %77 : f32 to vector<1x128xf32>
    %79 = arith.mulf %78, %3 : vector<1x128xf32>
    %80 = arith.addf %62, %79 : vector<1x128xf32>
    %c4_69 = arith.constant 4 : index
    %c3_70 = arith.constant 3 : index
    %81 = memref.load %arg1[%c4_69, %c3_70] : memref<5x4xf32, #tpu.memory_space<smem>>
    %c0_71 = arith.constant 0 : index
    %c0_72 = arith.constant 0 : index
    %82 = memref.load %arg0[%c0_71, %c0_72] : memref<2x3xf32, #tpu.memory_space<smem>>
    %c4_73 = arith.constant 4 : index
    %c0_74 = arith.constant 0 : index
    %83 = memref.load %arg1[%c4_73, %c0_74] : memref<5x4xf32, #tpu.memory_space<smem>>
    %84 = arith.mulf %82, %83 : f32
    %85 = arith.addf %81, %84 : f32
    %c0_75 = arith.constant 0 : index
    %c1_76 = arith.constant 1 : index
    %86 = memref.load %arg0[%c0_75, %c1_76] : memref<2x3xf32, #tpu.memory_space<smem>>
    %c4_77 = arith.constant 4 : index
    %c1_78 = arith.constant 1 : index
    %87 = memref.load %arg1[%c4_77, %c1_78] : memref<5x4xf32, #tpu.memory_space<smem>>
    %88 = arith.mulf %86, %87 : f32
    %89 = arith.addf %85, %88 : f32
    %c0_79 = arith.constant 0 : index
    %c2_80 = arith.constant 2 : index
    %90 = memref.load %arg0[%c0_79, %c2_80] : memref<2x3xf32, #tpu.memory_space<smem>>
    %c4_81 = arith.constant 4 : index
    %c2_82 = arith.constant 2 : index
    %91 = memref.load %arg1[%c4_81, %c2_82] : memref<5x4xf32, #tpu.memory_space<smem>>
    %92 = arith.mulf %90, %91 : f32
    %93 = arith.addf %89, %92 : f32
    %cst_83 = arith.constant 0.000000e+00 : f32
    %94 = arith.maximumf %93, %cst_83 : f32
    %cst_84 = arith.constant 6.000000e+00 : f32
    %95 = arith.minimumf %94, %cst_84 : f32
    %96 = vector.broadcast %95 : f32 to vector<1x128xf32>
    %97 = arith.mulf %96, %4 : vector<1x128xf32>
    %98 = arith.addf %80, %97 : vector<1x128xf32>
    %c1_i32 = arith.constant 1 : i32
    %99 = vector.broadcast %c1_i32 : i32 to vector<8x128xi32>
    %100 = arith.cmpi eq, %6, %99 : vector<8x128xi32>
    %c0_85 = arith.constant 0 : index
    %c3_86 = arith.constant 3 : index
    %101 = memref.load %arg1[%c0_85, %c3_86] : memref<5x4xf32, #tpu.memory_space<smem>>
    %c1_87 = arith.constant 1 : index
    %c0_88 = arith.constant 0 : index
    %102 = memref.load %arg0[%c1_87, %c0_88] : memref<2x3xf32, #tpu.memory_space<smem>>
    %c0_89 = arith.constant 0 : index
    %c0_90 = arith.constant 0 : index
    %103 = memref.load %arg1[%c0_89, %c0_90] : memref<5x4xf32, #tpu.memory_space<smem>>
    %104 = arith.mulf %102, %103 : f32
    %105 = arith.addf %101, %104 : f32
    %c1_91 = arith.constant 1 : index
    %c1_92 = arith.constant 1 : index
    %106 = memref.load %arg0[%c1_91, %c1_92] : memref<2x3xf32, #tpu.memory_space<smem>>
    %c0_93 = arith.constant 0 : index
    %c1_94 = arith.constant 1 : index
    %107 = memref.load %arg1[%c0_93, %c1_94] : memref<5x4xf32, #tpu.memory_space<smem>>
    %108 = arith.mulf %106, %107 : f32
    %109 = arith.addf %105, %108 : f32
    %c1_95 = arith.constant 1 : index
    %c2_96 = arith.constant 2 : index
    %110 = memref.load %arg0[%c1_95, %c2_96] : memref<2x3xf32, #tpu.memory_space<smem>>
    %c0_97 = arith.constant 0 : index
    %c2_98 = arith.constant 2 : index
    %111 = memref.load %arg1[%c0_97, %c2_98] : memref<5x4xf32, #tpu.memory_space<smem>>
    %112 = arith.mulf %110, %111 : f32
    %113 = arith.addf %109, %112 : f32
    %cst_99 = arith.constant 0.000000e+00 : f32
    %114 = arith.maximumf %113, %cst_99 : f32
    %cst_100 = arith.constant 6.000000e+00 : f32
    %115 = arith.minimumf %114, %cst_100 : f32
    %116 = vector.broadcast %115 : f32 to vector<1x128xf32>
    %117 = arith.mulf %116, %0 : vector<1x128xf32>
    %118 = arith.addf %5, %117 : vector<1x128xf32>
    %c1_101 = arith.constant 1 : index
    %c3_102 = arith.constant 3 : index
    %119 = memref.load %arg1[%c1_101, %c3_102] : memref<5x4xf32, #tpu.memory_space<smem>>
    %c1_103 = arith.constant 1 : index
    %c0_104 = arith.constant 0 : index
    %120 = memref.load %arg0[%c1_103, %c0_104] : memref<2x3xf32, #tpu.memory_space<smem>>
    %c1_105 = arith.constant 1 : index
    %c0_106 = arith.constant 0 : index
    %121 = memref.load %arg1[%c1_105, %c0_106] : memref<5x4xf32, #tpu.memory_space<smem>>
    %122 = arith.mulf %120, %121 : f32
    %123 = arith.addf %119, %122 : f32
    %c1_107 = arith.constant 1 : index
    %c1_108 = arith.constant 1 : index
    %124 = memref.load %arg0[%c1_107, %c1_108] : memref<2x3xf32, #tpu.memory_space<smem>>
    %c1_109 = arith.constant 1 : index
    %c1_110 = arith.constant 1 : index
    %125 = memref.load %arg1[%c1_109, %c1_110] : memref<5x4xf32, #tpu.memory_space<smem>>
    %126 = arith.mulf %124, %125 : f32
    %127 = arith.addf %123, %126 : f32
    %c1_111 = arith.constant 1 : index
    %c2_112 = arith.constant 2 : index
    %128 = memref.load %arg0[%c1_111, %c2_112] : memref<2x3xf32, #tpu.memory_space<smem>>
    %c1_113 = arith.constant 1 : index
    %c2_114 = arith.constant 2 : index
    %129 = memref.load %arg1[%c1_113, %c2_114] : memref<5x4xf32, #tpu.memory_space<smem>>
    %130 = arith.mulf %128, %129 : f32
    %131 = arith.addf %127, %130 : f32
    %cst_115 = arith.constant 0.000000e+00 : f32
    %132 = arith.maximumf %131, %cst_115 : f32
    %cst_116 = arith.constant 6.000000e+00 : f32
    %133 = arith.minimumf %132, %cst_116 : f32
    %134 = vector.broadcast %133 : f32 to vector<1x128xf32>
    %135 = arith.mulf %134, %1 : vector<1x128xf32>
    %136 = arith.addf %118, %135 : vector<1x128xf32>
    %c2_117 = arith.constant 2 : index
    %c3_118 = arith.constant 3 : index
    %137 = memref.load %arg1[%c2_117, %c3_118] : memref<5x4xf32, #tpu.memory_space<smem>>
    %c1_119 = arith.constant 1 : index
    %c0_120 = arith.constant 0 : index
    %138 = memref.load %arg0[%c1_119, %c0_120] : memref<2x3xf32, #tpu.memory_space<smem>>
    %c2_121 = arith.constant 2 : index
    %c0_122 = arith.constant 0 : index
    %139 = memref.load %arg1[%c2_121, %c0_122] : memref<5x4xf32, #tpu.memory_space<smem>>
    %140 = arith.mulf %138, %139 : f32
    %141 = arith.addf %137, %140 : f32
    %c1_123 = arith.constant 1 : index
    %c1_124 = arith.constant 1 : index
    %142 = memref.load %arg0[%c1_123, %c1_124] : memref<2x3xf32, #tpu.memory_space<smem>>
    %c2_125 = arith.constant 2 : index
    %c1_126 = arith.constant 1 : index
    %143 = memref.load %arg1[%c2_125, %c1_126] : memref<5x4xf32, #tpu.memory_space<smem>>
    %144 = arith.mulf %142, %143 : f32
    %145 = arith.addf %141, %144 : f32
    %c1_127 = arith.constant 1 : index
    %c2_128 = arith.constant 2 : index
    %146 = memref.load %arg0[%c1_127, %c2_128] : memref<2x3xf32, #tpu.memory_space<smem>>
    %c2_129 = arith.constant 2 : index
    %c2_130 = arith.constant 2 : index
    %147 = memref.load %arg1[%c2_129, %c2_130] : memref<5x4xf32, #tpu.memory_space<smem>>
    %148 = arith.mulf %146, %147 : f32
    %149 = arith.addf %145, %148 : f32
    %cst_131 = arith.constant 0.000000e+00 : f32
    %150 = arith.maximumf %149, %cst_131 : f32
    %cst_132 = arith.constant 6.000000e+00 : f32
    %151 = arith.minimumf %150, %cst_132 : f32
    %152 = vector.broadcast %151 : f32 to vector<1x128xf32>
    %153 = arith.mulf %152, %2 : vector<1x128xf32>
    %154 = arith.addf %136, %153 : vector<1x128xf32>
    %c3_133 = arith.constant 3 : index
    %c3_134 = arith.constant 3 : index
    %155 = memref.load %arg1[%c3_133, %c3_134] : memref<5x4xf32, #tpu.memory_space<smem>>
    %c1_135 = arith.constant 1 : index
    %c0_136 = arith.constant 0 : index
    %156 = memref.load %arg0[%c1_135, %c0_136] : memref<2x3xf32, #tpu.memory_space<smem>>
    %c3_137 = arith.constant 3 : index
    %c0_138 = arith.constant 0 : index
    %157 = memref.load %arg1[%c3_137, %c0_138] : memref<5x4xf32, #tpu.memory_space<smem>>
    %158 = arith.mulf %156, %157 : f32
    %159 = arith.addf %155, %158 : f32
    %c1_139 = arith.constant 1 : index
    %c1_140 = arith.constant 1 : index
    %160 = memref.load %arg0[%c1_139, %c1_140] : memref<2x3xf32, #tpu.memory_space<smem>>
    %c3_141 = arith.constant 3 : index
    %c1_142 = arith.constant 1 : index
    %161 = memref.load %arg1[%c3_141, %c1_142] : memref<5x4xf32, #tpu.memory_space<smem>>
    %162 = arith.mulf %160, %161 : f32
    %163 = arith.addf %159, %162 : f32
    %c1_143 = arith.constant 1 : index
    %c2_144 = arith.constant 2 : index
    %164 = memref.load %arg0[%c1_143, %c2_144] : memref<2x3xf32, #tpu.memory_space<smem>>
    %c3_145 = arith.constant 3 : index
    %c2_146 = arith.constant 2 : index
    %165 = memref.load %arg1[%c3_145, %c2_146] : memref<5x4xf32, #tpu.memory_space<smem>>
    %166 = arith.mulf %164, %165 : f32
    %167 = arith.addf %163, %166 : f32
    %cst_147 = arith.constant 0.000000e+00 : f32
    %168 = arith.maximumf %167, %cst_147 : f32
    %cst_148 = arith.constant 6.000000e+00 : f32
    %169 = arith.minimumf %168, %cst_148 : f32
    %170 = vector.broadcast %169 : f32 to vector<1x128xf32>
    %171 = arith.mulf %170, %3 : vector<1x128xf32>
    %172 = arith.addf %154, %171 : vector<1x128xf32>
    %c4_149 = arith.constant 4 : index
    %c3_150 = arith.constant 3 : index
    %173 = memref.load %arg1[%c4_149, %c3_150] : memref<5x4xf32, #tpu.memory_space<smem>>
    %c1_151 = arith.constant 1 : index
    %c0_152 = arith.constant 0 : index
    %174 = memref.load %arg0[%c1_151, %c0_152] : memref<2x3xf32, #tpu.memory_space<smem>>
    %c4_153 = arith.constant 4 : index
    %c0_154 = arith.constant 0 : index
    %175 = memref.load %arg1[%c4_153, %c0_154] : memref<5x4xf32, #tpu.memory_space<smem>>
    %176 = arith.mulf %174, %175 : f32
    %177 = arith.addf %173, %176 : f32
    %c1_155 = arith.constant 1 : index
    %c1_156 = arith.constant 1 : index
    %178 = memref.load %arg0[%c1_155, %c1_156] : memref<2x3xf32, #tpu.memory_space<smem>>
    %c4_157 = arith.constant 4 : index
    %c1_158 = arith.constant 1 : index
    %179 = memref.load %arg1[%c4_157, %c1_158] : memref<5x4xf32, #tpu.memory_space<smem>>
    %180 = arith.mulf %178, %179 : f32
    %181 = arith.addf %177, %180 : f32
    %c1_159 = arith.constant 1 : index
    %c2_160 = arith.constant 2 : index
    %182 = memref.load %arg0[%c1_159, %c2_160] : memref<2x3xf32, #tpu.memory_space<smem>>
    %c4_161 = arith.constant 4 : index
    %c2_162 = arith.constant 2 : index
    %183 = memref.load %arg1[%c4_161, %c2_162] : memref<5x4xf32, #tpu.memory_space<smem>>
    %184 = arith.mulf %182, %183 : f32
    %185 = arith.addf %181, %184 : f32
    %cst_163 = arith.constant 0.000000e+00 : f32
    %186 = arith.maximumf %185, %cst_163 : f32
    %cst_164 = arith.constant 6.000000e+00 : f32
    %187 = arith.minimumf %186, %cst_164 : f32
    %188 = vector.broadcast %187 : f32 to vector<1x128xf32>
    %189 = arith.mulf %188, %4 : vector<1x128xf32>
    %190 = arith.addf %172, %189 : vector<1x128xf32>
    %cst_165 = arith.constant 0.000000e+00 : f32
    %191 = vector.shape_cast %190 : vector<1x128xf32> to vector<1x128xf32>
    %192 = vector.broadcast %191 : vector<1x128xf32> to vector<8x128xf32>
    %193 = vector.broadcast %cst_165 : f32 to vector<8x128xf32>
    %194 = arith.select %100, %192, %193 : vector<8x128xi1>, vector<8x128xf32>
    %195 = vector.shape_cast %98 : vector<1x128xf32> to vector<1x128xf32>
    %196 = vector.broadcast %195 : vector<1x128xf32> to vector<8x128xf32>
    %197 = arith.select %8, %196, %194 : vector<8x128xi1>, vector<8x128xf32>
    %c0_166 = arith.constant 0 : index
    %c0_167 = arith.constant 0 : index
    %198 = vector.load %arg3[%c0_166, %c0_167] : memref<8x128xf32, #tpu.memory_space<vmem>>, vector<8x128xf32>
    tpu.vector_store %arg3[%c0_166, %c0_167], %197 {strides = array<i32>} : memref<8x128xf32, #tpu.memory_space<vmem>>, vector<8x128xf32>,
    return
  }
}

</mosaic_0001>

<llo_original>
// kernel: model_forward.1
$region0: #{model_forward.1}
  #allocation0 [shape = 'u32[]', space=smem, size = 0x4, offset = 0x4, fixed_abs, tag = 'smem constant byte address 0x4 - core index']
  #allocation1 [shape = 'u32[144,128]{1,0:T(1,128)}', space=vmem, size = 0x12000, scoped, tag = 'internal scratch']
  %s0 = inlined_call_operand.vmem [shape: f32[2,3], index: 0, kind: input, shape index: {}]
  %s1 = inlined_call_operand.vmem [shape: f32[5,4], index: 1, kind: input, shape index: {}]
  %s2 = inlined_call_operand.vmem [shape: f32[8,128], index: 2, kind: input, shape index: {}]
  %s3 = inlined_call_operand.vmem [shape: f32[8,128], index: 3, kind: output, shape index: {}]
  %s4 = sld [smem:[#allocation0]]
  $region30: #{model_forward.1} parent=0
    _
  %s6 = ssub.s32 1, %s4
  %s7 = scalar_select 0, %s6, %s4
  $region1: #{model_forward.1} parent=0
    #allocation2 [shape = 'u8[1024]{0}', space=smem, size = 0x400, scoped, tag = 'input window, operand 0, single buffered']
    #allocation3 [shape = 's32[1]{0}', space=sflag, size = 0x4, scoped, tag = 'scoped memory for model_forward.1']
    #allocation4 [shape = 'u8[4096]{0}', space=smem, size = 0x1000, scoped, tag = 'input window, operand 1, single buffered']
    #allocation5 [shape = 's32[1]{0}', space=sflag, size = 0x4, scoped, tag = 'scoped memory for model_forward.1']
    %8 = vsyncpa [#allocation3], 0
    %9 = vsyncpa [#allocation5], 0
    // Predicated region
    $region2: #{model_forward.1} parent=1 // pred_check
      _
    $region3: #{model_forward.1} parent=1 // pred_check_branch
      %11 = sbr.rel (0) target = $region5
    $region4: #{model_forward.1} parent=1 // pred_region
      %s13 = ssub.s32 32, 32
      %14 = vsyncadd [#allocation3], %s13
      %s16 = sshll.u32 %s0, 4
      %s17 = int_to_ptr.vmem [resolvable:$true] %s16
      %19 = dma.vmem_to_smem %s17, 32, [#allocation2], [#allocation3]
    $region5: #{model_forward.1} parent=1 // pred_fallthru
      _
    // Predicated region
    $region6: #{model_forward.1} parent=1 // pred_check
      _
    $region7: #{model_forward.1} parent=1 // pred_check_branch
      %21 = sbr.rel (0) target = $region9
    $region8: #{model_forward.1} parent=1 // pred_region
      %s23 = ssub.s32 128, 128
      %24 = vsyncadd [#allocation5], %s23
      %s26 = sshll.u32 %s1, 4
      %s27 = int_to_ptr.vmem [resolvable:$true] %s26
      %29 = dma.vmem_to_smem %s27, 128, [#allocation4], [#allocation5]
    $region9: #{model_forward.1} parent=1 // pred_fallthru
      _
    // Predicated region
    $region10: #{model_forward.1} parent=1 // pred_check
      _
    $region11: #{model_forward.1} parent=1 // pred_check_branch
      %31 = sbr.rel (0) target = $region13
    $region12: #{model_forward.1} parent=1 // pred_region
      _
    $region13: #{model_forward.1} parent=1 // pred_fallthru
      _
    // Predicated region
    $region14: #{model_forward.1} parent=1 // pred_check
      _
    $region15: #{model_forward.1} parent=1 // pred_check_branch
      %33 = sbr.rel (0) target = $region17
    $region16: #{model_forward.1} parent=1 // pred_region
      %34 = dma.done [#allocation3], 32
    $region17: #{model_forward.1} parent=1 // pred_fallthru
      _
    // Predicated region
    $region18: #{model_forward.1} parent=1 // pred_check
      _
    $region19: #{model_forward.1} parent=1 // pred_check_branch
      %36 = sbr.rel (0) target = $region21
    $region20: #{model_forward.1} parent=1 // pred_region
      %37 = dma.done [#allocation5], 128
    $region21: #{model_forward.1} parent=1 // pred_fallthru
      _
    %38 = sfence
    %v39 = vld [vmem:[%s2] sm:$0x1]
    %v40 = vld [vmem:[%s2 + $0x1] sm:$0x1]
    %v41 = vld [vmem:[%s2 + $0x2] sm:$0x1]
    %v42 = vld [vmem:[%s2 + $0x3] sm:$0x1]
    %v43 = vld [vmem:[%s2 + $0x4] sm:$0x1]
    %v44 = vld [vmem:[%s2 + $0x5] sm:$0x1]
    %v45 = vlaneseq
    %v46 = vshrl.u32 %v45, 7
    %vm47 = vcmp.eq.s32.totalorder %v46, 0
    %s48 = sld [smem:[#allocation4 + $0x3]]
    %s49 = sld [smem:[#allocation2]]
    %s50 = sld [smem:[#allocation4]]
    %s51 = smul.f32 %s49, %s50
    %s52 = sadd.f32 %s48, %s51
    %s53 = sld [smem:[#allocation2 + $0x1]]
    %s54 = sld [smem:[#allocation4 + $0x1]]
    %s55 = smul.f32 %s53, %s54
    %s56 = sadd.f32 %s52, %s55
    %s57 = sld [smem:[#allocation2 + $0x2]]
    %s58 = sld [smem:[#allocation4 + $0x2]]
    %s59 = smul.f32 %s57, %s58
    %s60 = sadd.f32 %s56, %s59
    %s61 = smax.f32 %s60, 0.0
    %s62 = smin.f32 %s61, 6.0
    %v63 = vstv %s62
    %v64 = vmul.f32 %v63, %v39
    %v65 = vadd.f32 %v44, %v64
    %s66 = sld [smem:[#allocation4 + $0x83]]
    %s67 = sld [smem:[#allocation4 + $0x80]]
    %s68 = smul.f32 %s49, %s67
    %s69 = sadd.f32 %s66, %s68
    %s70 = sld [smem:[#allocation4 + $0x81]]
    %s71 = smul.f32 %s53, %s70
    %s72 = sadd.f32 %s69, %s71
    %s73 = sld [smem:[#allocation4 + $0x82]]
    %s74 = smul.f32 %s57, %s73
    %s75 = sadd.f32 %s72, %s74
    %s76 = smax.f32 %s75, 0.0
    %s77 = smin.f32 %s76, 6.0
    %v78 = vstv %s77
    %v79 = vmul.f32 %v78, %v40
    %v80 = vadd.f32 %v65, %v79
    %s81 = sld [smem:[#allocation4 + $0x103]]
    %s82 = sld [smem:[#allocation4 + $0x100]]
    %s83 = smul.f32 %s49, %s82
    %s84 = sadd.f32 %s81, %s83
    %s85 = sld [smem:[#allocation4 + $0x101]]
    %s86 = smul.f32 %s53, %s85
    %s87 = sadd.f32 %s84, %s86
    %s88 = sld [smem:[#allocation4 + $0x102]]
    %s89 = smul.f32 %s57, %s88
    %s90 = sadd.f32 %s87, %s89
    %s91 = smax.f32 %s90, 0.0
    %s92 = smin.f32 %s91, 6.0
    %v93 = vstv %s92
    %v94 = vmul.f32 %v93, %v41
    %v95 = vadd.f32 %v80, %v94
    %s96 = sld [smem:[#allocation4 + $0x183]]
    %s97 = sld [smem:[#allocation4 + $0x180]]
    %s98 = smul.f32 %s49, %s97
    %s99 = sadd.f32 %s96, %s98
    %s100 = sld [smem:[#allocation4 + $0x181]]
    %s101 = smul.f32 %s53, %s100
    %s102 = sadd.f32 %s99, %s101
    %s103 = sld [smem:[#allocation4 + $0x182]]
    %s104 = smul.f32 %s57, %s103
    %s105 = sadd.f32 %s102, %s104
    %s106 = smax.f32 %s105, 0.0
    %s107 = smin.f32 %s106, 6.0
    %v108 = vstv %s107
    %v109 = vmul.f32 %v108, %v42
    %v110 = vadd.f32 %v95, %v109
    %s111 = sld [smem:[#allocation4 + $0x203]]
    %s112 = sld [smem:[#allocation4 + $0x200]]
    %s113 = smul.f32 %s49, %s112
    %s114 = sadd.f32 %s111, %s113
    %s115 = sld [smem:[#allocation4 + $0x201]]
    %s116 = smul.f32 %s53, %s115
    %s117 = sadd.f32 %s114, %s116
    %s118 = sld [smem:[#allocation4 + $0x202]]
    %s119 = smul.f32 %s57, %s118
    %s120 = sadd.f32 %s117, %s119
    %s121 = smax.f32 %s120, 0.0
    %s122 = smin.f32 %s121, 6.0
    %v123 = vstv %s122
    %v124 = vmul.f32 %v123, %v43
    %v125 = vadd.f32 %v110, %v124
    %vm126 = vcmp.eq.s32.totalorder %v46, 1
    %s127 = sld [smem:[#allocation2 + $0x80]]
    %s128 = smul.f32 %s127, %s50
    %s129 = sadd.f32 %s48, %s128
    %s130 = sld [smem:[#allocation2 + $0x81]]
    %s131 = smul.f32 %s130, %s54
    %s132 = sadd.f32 %s129, %s131
    %s133 = sld [smem:[#allocation2 + $0x82]]
    %s134 = smul.f32 %s133, %s58
    %s135 = sadd.f32 %s132, %s134
    %s136 = smax.f32 %s135, 0.0
    %s137 = smin.f32 %s136, 6.0
    %v138 = vstv %s137
    %v139 = vmul.f32 %v138, %v39
    %v140 = vadd.f32 %v44, %v139
    %s141 = smul.f32 %s127, %s67
    %s142 = sadd.f32 %s66, %s141
    %s143 = smul.f32 %s130, %s70
    %s144 = sadd.f32 %s142, %s143
    %s145 = smul.f32 %s133, %s73
    %s146 = sadd.f32 %s144, %s145
    %s147 = smax.f32 %s146, 0.0
    %s148 = smin.f32 %s147, 6.0
    %v149 = vstv %s148
    %v150 = vmul.f32 %v149, %v40
    %v151 = vadd.f32 %v140, %v150
    %s152 = smul.f32 %s127, %s82
    %s153 = sadd.f32 %s81, %s152
    %s154 = smul.f32 %s130, %s85
    %s155 = sadd.f32 %s153, %s154
    %s156 = smul.f32 %s133, %s88
    %s157 = sadd.f32 %s155, %s156
    %s158 = smax.f32 %s157, 0.0
    %s159 = smin.f32 %s158, 6.0
    %v160 = vstv %s159
    %v161 = vmul.f32 %v160, %v41
    %v162 = vadd.f32 %v151, %v161
    %s163 = smul.f32 %s127, %s97
    %s164 = sadd.f32 %s96, %s163
    %s165 = smul.f32 %s130, %s100
    %s166 = sadd.f32 %s164, %s165
    %s167 = smul.f32 %s133, %s103
    %s168 = sadd.f32 %s166, %s167
    %s169 = smax.f32 %s168, 0.0
    %s170 = smin.f32 %s169, 6.0
    %v171 = vstv %s170
    %v172 = vmul.f32 %v171, %v42
    %v173 = vadd.f32 %v162, %v172
    %s174 = smul.f32 %s127, %s112
    %s175 = sadd.f32 %s111, %s174
    %s176 = smul.f32 %s130, %s115
    %s177 = sadd.f32 %s175, %s176
    %s178 = smul.f32 %s133, %s118
    %s179 = sadd.f32 %s177, %s178
    %s180 = smax.f32 %s179, 0.0
    %s181 = smin.f32 %s180, 6.0
    %v182 = vstv %s181
    %v183 = vmul.f32 %v182, %v43
    %v184 = vadd.f32 %v173, %v183
    %v185 = vlaneseq
    %v186 = vshrl.u32 %v185, 7
    %v187 = vsub.s32 0, %v186
    %v188 = vrot.slane %v184, %v187
    %v189 = vsel %vm126, %v188, 0.0
    %v190 = vlaneseq
    %v191 = vshrl.u32 %v190, 7
    %v192 = vsub.s32 0, %v191
    %v193 = vrot.slane %v125, %v192
    %v194 = vsel %vm47, %v193, %v189
    %195 = vst [vmem:[%s3] sm:$0xff] %v194
    // Predicated region
    $region22: #{model_forward.1} parent=1 // pred_check
      _
    $region23: #{model_forward.1} parent=1 // pred_check_branch
      %197 = sbr.rel (0) target = $region25
    $region24: #{model_forward.1} parent=1 // pred_region
      _
    $region25: #{model_forward.1} parent=1 // pred_fallthru
      _
    // Predicated region
    $region26: #{model_forward.1} parent=1 // pred_check
      _
    $region27: #{model_forward.1} parent=1 // pred_check_branch
      %199 = sbr.rel (0) target = $region29
    $region28: #{model_forward.1} parent=1 // pred_region
      _
    $region29: #{model_forward.1} parent=1 // pred_fallthru
      _
    %200 = vsyncpa [#allocation3], 1
    %201 = vsyncpa [#allocation5], 1

</llo_original>
